<compile_context>
chip_gen: v7x
topology: tpu7x:2x2x1
jax: 0.10.0
libtpu: 0.0.40
codegen_flags: <defaults>
</compile_context>

<pallas_src>
import jax
import jax.numpy as jnp
import numpy as np
from jax.experimental import pallas as pl
from jax.experimental.pallas import tpu as pltpu

LANE = 128
SUBLANE = 8


def _ru(x, m):
    return (x + m - 1) // m * m


def _cdiv(a, b):
    return -(-a // b)


def _vmem_budget():
    """Per-generation VMEM plan (bytes): (planned occupancy, scoped limit)."""
    try:
        cap = int(pltpu.get_tpu_info().vmem_capacity_bytes)
    except Exception:
        cap = 64 * 1024 * 1024          # conservative (v7x-sized) default
    budget = (cap * 5) // 8             # what the tiling plans to occupy
    limit = (cap * 7) // 8              # scoped-VMEM limit (headroom for Mosaic)
    return budget, limit


# --------------------------------------------------------------------------
# Fast path: 2x2 stride-1 conv on the space-to-depth input, taps gathered
# in-kernel from the per-image VMEM slab, 4 accumulated MXU matmuls.
# --------------------------------------------------------------------------
def _ds4_s2d_kernel(xs_ref, w_ref, b_ref, o_ref):
    # xs_ref : (1, Hsp, Wsp, C4)  full s2d slab of image n (reused over j, i)
    # w_ref  : (4, C4, tn)        per-tap weights, tap t = 2*dh + dw
    # b_ref  : (1, tn)            bias (f32)
    # o_ref  : (1, tile_ho, Wop, tn)
    tile_ho, wop, tn = o_ref.shape[1], o_ref.shape[2], o_ref.shape[3]
    c4 = xs_ref.shape[3]
    ho0 = pl.program_id(2) * tile_ho

    acc = None
    for dh in range(2):
        # rows [ho0+dh, ho0+dh+tile_ho) of the slab -> (tile_ho, Wsp, C4).
        rows = xs_ref[0, pl.ds(ho0 + dh, tile_ho), :, :]
        for dw in range(2):
            tap = rows[:, dw:dw + wop, :].reshape(tile_ho * wop, c4)
            part = jnp.dot(tap, w_ref[2 * dh + dw],
                           preferred_element_type=jnp.float32)
            acc = part if acc is None else acc + part
    # Bias fused into the tile write (kept on the VPU; folding it into the MXU
    # as an extra K row is a micro-opt that only matters once HBM-bound).
    out = acc + b_ref[...]
    o_ref[0] = out.reshape(tile_ho, wop, tn).astype(o_ref.dtype)


# --------------------------------------------------------------------------
# Fallback (very large spatial extents): lane-dense im2col matmul + bias.
# --------------------------------------------------------------------------
def _im2col_matmul_kernel(p_ref, w_ref, b_ref, o_ref):
    o_ref[...] = (
        jnp.dot(p_ref[...], w_ref[...], preferred_element_type=jnp.float32)
        + b_ref[...]
    ).astype(o_ref.dtype)


def downsample4_forward(x_nchw, weight, bias, *, use_bf16_mxu=False,
                        channels_last=False):
    """Conv2d(kernel=4, stride=2, padding=1), PyTorch NCHW semantics.

    x: (N, Cin, H, W), weight: (Cout, Cin, 4, 4), bias: (Cout,).
    Returns NCHW by default; channels_last=True skips the final transpose
    (one fewer full-output HBM pass) for NHWC consumers.
    """
    N, Cin, H, W = x_nchw.shape
    Cout = weight.shape[0]
    K, S, P = 4, 2, 1
    Ho = (H + 2 * P - K) // S + 1
    Wo = (W + 2 * P - K) // S + 1
    assert Ho >= 1 and Wo >= 1, (Ho, Wo)

    out_dtype = x_nchw.dtype
    in_dtype = jnp.bfloat16 if use_bf16_mxu else out_dtype
    esz_in = jnp.dtype(in_dtype).itemsize
    esz_out = jnp.dtype(out_dtype).itemsize
    # Sublane packing granule of the matmul M dim (8 f32 / 16 bf16 / 32 int8).
    m_align = max(SUBLANE, 32 // esz_in)

    C4 = 4 * Cin                       # space-to-depth channel count
    budget, vmem_limit = _vmem_budget()

    # ---- Cout tile: multiple of 128 (lane-dense unmasked stores) and small
    #      enough that the (4, C4, tn) weight block (x2 pipeline buffers) is a
    #      modest VMEM fraction -> big layers still compile on v7x (64 MiB). ----
    tn = _ru(Cout, LANE)
    while tn > LANE and 4 * _ru(C4, SUBLANE) * tn * esz_in * 2 > budget // 4:
        tn -= LANE
    n_j = _cdiv(_ru(Cout, LANE), tn)
    Coutp = n_j * tn

    # Wo padded to the sublane granule: in-kernel (tile_ho, Wop, C4) ->
    # (tile_ho*Wop, C4) reshapes are layout-preserving, output stores dense.
    Wop = _ru(Wo, m_align)
    Wsp = Wop + 1

    # ---- weights -> per-tap (4, C4, Coutp): tap t = 2*dh + dw, channel order
    #      (dr, dc, ci) matching the s2d input layout ----
    w = jnp.transpose(weight, (2, 3, 1, 0))          # (kh, kw, Cin, Cout)
    w = w.reshape(2, 2, 2, 2, Cin, Cout)             # (dh, dr, dw, dc, Cin, Cout)
    w = jnp.transpose(w, (0, 2, 1, 3, 4, 5))         # (dh, dw, dr, dc, Cin, Cout)
    w = w.reshape(4, C4, Cout)
    w = jnp.pad(w, ((0, 0), (0, 0), (0, Coutp - Cout))).astype(in_dtype)
    b2 = jnp.pad(bias.reshape(1, Cout).astype(jnp.float32),
                 ((0, 0), (0, Coutp - Cout)))

    def space_to_depth(hsp):
        # Pad the NCHW input so the padded spatial extent is exactly
        # (2*hsp, 2*Wsp), then fold the 2x2 sub-pixel into channels.
        # This is the ONLY wrapper-side data pass (1x input size); the old
        # version materialized a 4x im2col slab in HBM here.
        rp, cp = 2 * hsp, 2 * Wsp
        xp = jnp.pad(x_nchw, ((0, 0), (0, 0), (P, rp - H - P), (P, cp - W - P)))
        xp = jnp.transpose(xp, (0, 2, 3, 1))                       # NHWC
        xs = xp.reshape(N, hsp, 2, Wsp, 2, Cin)
        xs = jnp.transpose(xs, (0, 1, 3, 2, 4, 5)).reshape(N, hsp, Wsp, C4)
        return xs.astype(in_dtype)

    # ---- per-step VMEM accounting for the fast path (weights INCLUDED now).
    #      Note: C4 is intentionally NOT padded to 128 here (it would inflate
    #      HBM input traffic up to 8x for small Cin; the MXU pads K internally).
    slab_plane = _ru(Wsp, SUBLANE) * _ru(C4, LANE)            # one padded slab row
    fixed = ((Ho + 1) * slab_plane * esz_in * 2               # s2d slab x2 buffers
             + 4 * _ru(C4, SUBLANE) * tn * esz_in * 2         # weight block x2
             + SUBLANE * tn * 4 * 2)                          # bias row x2
    per_row = (_ru(Wop, SUBLANE) * tn * (esz_out + 4) * 2     # out tile + f32 acc/epilogue
               + 3 * slab_plane * esz_in)                     # in-kernel row/tap temps
    avail = budget - fixed

    if avail >= per_row:
        # ============================ fast path ============================
        tile_ho = int(min(Ho, max(1, avail // per_row)))
        if N * n_j == 1 and Ho >= 2:
            # Guarantee >= 2 grid steps so both v7x TensorCores get work.
            tile_ho = min(tile_ho, _cdiv(Ho, 2))
        n_i = _cdiv(Ho, tile_ho)
        Hop = n_i * tile_ho
        Hsp = Hop + 1

        xs = space_to_depth(Hsp)

        out = pl.pallas_call(
            _ds4_s2d_kernel,
            out_shape=jax.ShapeDtypeStruct((N, Hop, Wop, Coutp), out_dtype),
            grid_spec=pltpu.PrefetchScalarGridSpec(
                num_scalar_prefetch=0,
                grid=(N, n_j, n_i),
                in_specs=[
                    # Whole s2d slab of image n: fetched once, reused over (j, i).
                    pl.BlockSpec((1, Hsp, Wsp, C4), lambda n, j, i: (n, 0, 0, 0)),
                    pl.BlockSpec((4, C4, tn), lambda n, j, i: (0, 0, j)),
                    pl.BlockSpec((1, tn), lambda n, j, i: (0, j)),
                ],
                out_specs=pl.BlockSpec((1, tile_ho, Wop, tn),
                                       lambda n, j, i: (n, i, 0, j)),
            ),
            compiler_params=pltpu.CompilerParams(
                dimension_semantics=("parallel", "parallel", "parallel"),
                vmem_limit_bytes=int(vmem_limit),
            ),
        )(xs, w, b2)
        out = out[:, :Ho, :Wo, :Cout]
    else:
        # ====== fallback: M-tiled im2col matmul (huge spatial extents) ======
        Hsp = Ho + 1
        xs = space_to_depth(Hsp)
        taps = [xs[:, dh:dh + Ho, dw:dw + Wo, :]
                for dh in range(2) for dw in range(2)]
        Kc = 4 * C4
        Kcp = _ru(Kc, LANE)                       # lane-dense LHS loads
        M = N * Ho * Wo
        patches = jnp.concatenate(taps, axis=-1).reshape(M, Kc)
        patches = jnp.pad(patches, ((0, 0), (0, Kcp - Kc)))
        wf = jnp.pad(w.reshape(Kc, Coutp), ((0, Kcp - Kc), (0, 0)))

        # Budget includes the (Kcp, tn) weight block (x2 buffers).
        fixed_f = Kcp * tn * esz_in * 2 + SUBLANE * tn * 4 * 2
        per_row_f = Kcp * esz_in * 2 + tn * (esz_out * 2 + 4)
        tm = (budget - fixed_f) // max(per_row_f, 1)
        tm = max(m_align, min(2048, tm // m_align * m_align))
        if M >= 2 * m_align:
            tm = min(tm, _ru(_cdiv(M, 2), m_align))   # >= 2 M tiles (v7x megacore)
        Mp = _ru(M, tm)
        if Mp != M:
            patches = jnp.pad(patches, ((0, Mp - M), (0, 0)))

        out_flat = pl.pallas_call(
            _im2col_matmul_kernel,
            out_shape=jax.ShapeDtypeStruct((Mp, Coutp), out_dtype),
            grid_spec=pltpu.PrefetchScalarGridSpec(
                num_scalar_prefetch=0,
                grid=(Mp // tm, n_j),
                in_specs=[
                    pl.BlockSpec((tm, Kcp), lambda i, j: (i, 0)),
                    pl.BlockSpec((Kcp, tn), lambda i, j: (0, j)),
                    pl.BlockSpec((1, tn), lambda i, j: (0, j)),
                ],
                out_specs=pl.BlockSpec((tm, tn), lambda i, j: (i, j)),
            ),
            compiler_params=pltpu.CompilerParams(
                dimension_semantics=("parallel", "parallel"),
                vmem_limit_bytes=int(vmem_limit),
            ),
        )(patches, wf, b2)
        out = out_flat[:M, :Cout].reshape(N, Ho, Wo, Cout)

    if channels_last:
        return out                                # (N, Ho, Wo, Cout)
    # NCHW to match the PyTorch module; use channels_last=True to skip this
    # extra output-sized pass when the consumer is layout-agnostic.
    return jnp.transpose(out, (0, 3, 1, 2))


if __name__ == "__main__":
    key = jax.random.PRNGKey(0)
    kx, kw, kb = jax.random.split(key, 3)

    N, Cin, H, W = 2, 4, 16, 16
    Cout = 8

    x = jax.random.normal(kx, (N, Cin, H, W), dtype=jnp.float32)
    # Deterministic synthetic parameters (same shapes as nn.Conv2d(Cin, Cout, 4)).
    fan_in = Cin * 4 * 4
    bound = 1.0 / np.sqrt(fan_in)
    weight = jax.random.uniform(
        kw, (Cout, Cin, 4, 4), dtype=jnp.float32, minval=-bound, maxval=bound
    )
    bias = jax.random.uniform(
        kb, (Cout,), dtype=jnp.float32, minval=-bound, maxval=bound
    )

    fwd = jax.jit(downsample4_forward)
    out = fwd(x, weight, bias)
    out = jax.block_until_ready(out)

    # Reference check against XLA's conv (same semantics as torch Conv2d NCHW).
    ref = jax.lax.conv_general_dilated(
        x, weight, window_strides=(2, 2), padding=((1, 1), (1, 1)),
        dimension_numbers=("NCHW", "OIHW", "NCHW"),
    ) + bias.reshape(1, Cout, 1, 1)

    assert out.shape == (N, Cout, H // 2, W // 2), out.shape
    np.testing.assert_allclose(np.asarray(out), np.asarray(ref),
                               rtol=1e-5, atol=1e-5)

    print("KERNEL_OK")
</pallas_src>

<mosaic_0001>
module attributes {stable_mosaic.version = 11 : i64} {
  func.func @_ds4_s2d_kernel(%arg0: i32, %arg1: i32, %arg2: i32, %arg3: memref<1x9x9x16xf32, #tpu.memory_space<vmem>>, %arg4: memref<4x16x128xf32, #tpu.memory_space<vmem>>, %arg5: memref<1x128xf32, #tpu.memory_space<vmem>>, %arg6: memref<1x8x8x128xf32, #tpu.memory_space<vmem>>) attributes {dimension_semantics = [#tpu.dimension_semantics<parallel>, #tpu.dimension_semantics<parallel>, #tpu.dimension_semantics<parallel>], iteration_bounds = array<i64: 2, 1, 1>, scalar_prefetch = 0 : i64, scratch_operands = 0 : i64, tpu.core_type = #tpu.core_type<tc>, window_params = [{transform_indices = @transform_0, window_bounds = array<i64: 1, 9, 9, 16>}, {transform_indices = @transform_1, window_bounds = array<i64: 4, 16, 128>}, {transform_indices = @transform_2, window_bounds = array<i64: 1, 128>}, {transform_indices = @transform_3, window_bounds = array<i64: 1, 8, 8, 128>}]} {
    %c8_i32 = arith.constant 8 : i32
    %0 = arith.muli %arg2, %c8_i32 : i32
    %c0_i32 = arith.constant 0 : i32
    %1 = arith.addi %0, %c0_i32 : i32
    %c0 = arith.constant 0 : index
    %2 = arith.index_cast %1 : i32 to index
    %c0_0 = arith.constant 0 : index
    %c0_1 = arith.constant 0 : index
    %3 = vector.load %arg3[%c0, %2, %c0_0, %c0_1] : memref<1x9x9x16xf32, #tpu.memory_space<vmem>>, vector<1x8x9x16xf32>
    %4 = vector.shape_cast %3 : vector<1x8x9x16xf32> to vector<8x9x16xf32>
    %5 = vector.extract_strided_slice %4 {offsets = [0, 0, 0], sizes = [8, 8, 16], strides = [1, 1, 1]} : vector<8x9x16xf32> to vector<8x8x16xf32>
    %6 = vector.shape_cast %5 : vector<8x8x16xf32> to vector<64x16xf32>
    %c0_2 = arith.constant 0 : index
    %c0_3 = arith.constant 0 : index
    %c0_4 = arith.constant 0 : index
    %7 = vector.load %arg4[%c0_2, %c0_3, %c0_4] : memref<4x16x128xf32, #tpu.memory_space<vmem>>, vector<1x16x128xf32>
    %8 = vector.shape_cast %7 : vector<1x16x128xf32> to vector<16x128xf32>
    %cst = arith.constant dense<0.000000e+00> : vector<64x128xf32>
    %9 = tpu.matmul %6, %8, %cst {dimension_numbers = #tpu.dot_dimension_numbers<[1], [0], [0], [1], [0, 0, 1, 1], [], []>} : vector<64x16xf32>, vector<16x128xf32>, vector<64x128xf32> -> vector<64x128xf32>
    %10 = vector.extract_strided_slice %4 {offsets = [0, 1, 0], sizes = [8, 8, 16], strides = [1, 1, 1]} : vector<8x9x16xf32> to vector<8x8x16xf32>
    %11 = vector.shape_cast %10 : vector<8x8x16xf32> to vector<64x16xf32>
    %c1 = arith.constant 1 : index
    %c0_5 = arith.constant 0 : index
    %c0_6 = arith.constant 0 : index
    %12 = vector.load %arg4[%c1, %c0_5, %c0_6] : memref<4x16x128xf32, #tpu.memory_space<vmem>>, vector<1x16x128xf32>
    %13 = vector.shape_cast %12 : vector<1x16x128xf32> to vector<16x128xf32>
    %cst_7 = arith.constant dense<0.000000e+00> : vector<64x128xf32>
    %14 = tpu.matmul %11, %13, %cst_7 {dimension_numbers = #tpu.dot_dimension_numbers<[1], [0], [0], [1], [0, 0, 1, 1], [], []>} : vector<64x16xf32>, vector<16x128xf32>, vector<64x128xf32> -> vector<64x128xf32>
    %15 = arith.addf %9, %14 : vector<64x128xf32>
    %c1_i32 = arith.constant 1 : i32
    %16 = arith.addi %0, %c1_i32 : i32
    %c0_8 = arith.constant 0 : index
    %17 = arith.index_cast %16 : i32 to index
    %c0_9 = arith.constant 0 : index
    %c0_10 = arith.constant 0 : index
    %18 = vector.load %arg3[%c0_8, %17, %c0_9, %c0_10] : memref<1x9x9x16xf32, #tpu.memory_space<vmem>>, vector<1x8x9x16xf32>
    %19 = vector.shape_cast %18 : vector<1x8x9x16xf32> to vector<8x9x16xf32>
    %20 = vector.extract_strided_slice %19 {offsets = [0, 0, 0], sizes = [8, 8, 16], strides = [1, 1, 1]} : vector<8x9x16xf32> to vector<8x8x16xf32>
    %21 = vector.shape_cast %20 : vector<8x8x16xf32> to vector<64x16xf32>
    %c2 = arith.constant 2 : index
    %c0_11 = arith.constant 0 : index
    %c0_12 = arith.constant 0 : index
    %22 = vector.load %arg4[%c2, %c0_11, %c0_12] : memref<4x16x128xf32, #tpu.memory_space<vmem>>, vector<1x16x128xf32>
    %23 = vector.shape_cast %22 : vector<1x16x128xf32> to vector<16x128xf32>
    %cst_13 = arith.constant dense<0.000000e+00> : vector<64x128xf32>
    %24 = tpu.matmul %21, %23, %cst_13 {dimension_numbers = #tpu.dot_dimension_numbers<[1], [0], [0], [1], [0, 0, 1, 1], [], []>} : vector<64x16xf32>, vector<16x128xf32>, vector<64x128xf32> -> vector<64x128xf32>
    %25 = arith.addf %15, %24 : vector<64x128xf32>
    %26 = vector.extract_strided_slice %19 {offsets = [0, 1, 0], sizes = [8, 8, 16], strides = [1, 1, 1]} : vector<8x9x16xf32> to vector<8x8x16xf32>
    %27 = vector.shape_cast %26 : vector<8x8x16xf32> to vector<64x16xf32>
    %c3 = arith.constant 3 : index
    %c0_14 = arith.constant 0 : index
    %c0_15 = arith.constant 0 : index
    %28 = vector.load %arg4[%c3, %c0_14, %c0_15] : memref<4x16x128xf32, #tpu.memory_space<vmem>>, vector<1x16x128xf32>
    %29 = vector.shape_cast %28 : vector<1x16x128xf32> to vector<16x128xf32>
    %cst_16 = arith.constant dense<0.000000e+00> : vector<64x128xf32>
    %30 = tpu.matmul %27, %29, %cst_16 {dimension_numbers = #tpu.dot_dimension_numbers<[1], [0], [0], [1], [0, 0, 1, 1], [], []>} : vector<64x16xf32>, vector<16x128xf32>, vector<64x128xf32> -> vector<64x128xf32>
    %31 = arith.addf %25, %30 : vector<64x128xf32>
    %c0_17 = arith.constant 0 : index
    %c0_18 = arith.constant 0 : index
    %32 = vector.load %arg5[%c0_17, %c0_18] : memref<1x128xf32, #tpu.memory_space<vmem>>, vector<1x128xf32>
    %33 = vector.broadcast %32 : vector<1x128xf32> to vector<64x128xf32>
    %34 = arith.addf %31, %33 : vector<64x128xf32>
    %35 = vector.shape_cast %34 : vector<64x128xf32> to vector<8x8x128xf32>
    %c0_19 = arith.constant 0 : index
    %c0_20 = arith.constant 0 : index
    %c0_21 = arith.constant 0 : index
    %c0_22 = arith.constant 0 : index
    %36 = vector.load %arg6[%c0_19, %c0_20, %c0_21, %c0_22] : memref<1x8x8x128xf32, #tpu.memory_space<vmem>>, vector<1x8x8x128xf32>
    %37 = vector.shape_cast %36 : vector<1x8x8x128xf32> to vector<8x8x128xf32>
    %38 = vector.shape_cast %35 : vector<8x8x128xf32> to vector<1x8x8x128xf32>
    tpu.vector_store %arg6[%c0_19, %c0_20, %c0_21, %c0_22], %38 {strides = array<i32>} : memref<1x8x8x128xf32, #tpu.memory_space<vmem>>, vector<1x8x8x128xf32>,
    return
  }
  func.func @transform_0(%arg0: i32, %arg1: i32, %arg2: i32) -> (i32, i32, i32, i32) {
    %c0_i32 = arith.constant 0 : i32
    %c0_i32_0 = arith.constant 0 : i32
    %c0_i32_1 = arith.constant 0 : i32
    %c0_i32_2 = arith.constant 0 : i32
    return %arg0, %c0_i32, %c0_i32_0, %c0_i32_1 : i32, i32, i32, i32
  }
  func.func @transform_1(%arg0: i32, %arg1: i32, %arg2: i32) -> (i32, i32, i32) {
    %c0_i32 = arith.constant 0 : i32
    %c0_i32_0 = arith.constant 0 : i32
    %c0_i32_1 = arith.constant 0 : i32
    return %c0_i32, %c0_i32_0, %arg1 : i32, i32, i32
  }
  func.func @transform_2(%arg0: i32, %arg1: i32, %arg2: i32) -> (i32, i32) {
    %c0_i32 = arith.constant 0 : i32
    %c0_i32_0 = arith.constant 0 : i32
    return %c0_i32, %arg1 : i32, i32
  }
  func.func @transform_3(%arg0: i32, %arg1: i32, %arg2: i32) -> (i32, i32, i32, i32) {
    %c0_i32 = arith.constant 0 : i32
    %c0_i32_0 = arith.constant 0 : i32
    return %arg0, %arg2, %c0_i32, %arg1 : i32, i32, i32, i32
  }
}

</mosaic_0001>

<llo_original>
// kernel: downsample4_forward.1
$region0: #{downsample4_forward.1}
  #allocation0 [shape = 'u32[]', space=smem, size = 0x4, offset = 0x4, fixed_abs, tag = 'smem constant byte address 0x4 - core index']
  #allocation1 [shape = 'u32[144,128]{1,0:T(1,128)}', space=vmem, size = 0x12000, scoped, tag = 'internal scratch']
  %s0 = inlined_call_operand.vmem [shape: f32[2,9,9,16], index: 0, kind: input, shape index: {}]
  %s1 = inlined_call_operand.vmem [shape: f32[4,16,128], index: 1, kind: input, shape index: {}]
  %s2 = inlined_call_operand.vmem [shape: f32[1,128], index: 2, kind: input, shape index: {}]
  %s3 = inlined_call_operand.vmem [shape: f32[2,8,8,128], index: 3, kind: output, shape index: {}]
  %s4 = sld [smem:[#allocation0]]
  $region45: #{downsample4_forward.1} parent=0
    _
  %s6 = ssub.s32 1, %s4
  %s7 = scalar_select 0, %s6, %s4
  loop: start=0, step=1, limit=4
  $region2: #{downsample4_forward.1} parent=0 // loop_pre_header
    _
  $region3: #{downsample4_forward.1} parent=0 // loop_header
    %s9 = sphi 0, %s13
    %p10 = scmp.ge.s32.totalorder %s9, 4
    %s16 = sphi 0, %s35
    %s17 = sphi 0, %s31
    %s18 = sphi 0, %s27
    %s19 = sphi 0, %s16
    %s20 = sphi 0, %s17
    %s21 = sphi 0, %s18
    %s22 = sphi 0, %s19
    %s23 = sphi 0, %s20
    %s24 = sphi 0, %s21
    %s38 = sphi 0, %s40
    %s41 = sphi 0, %s38
    %s42 = sphi 0, %s41
    %s58 = sphi 0, %s42
    %s64 = sphi 0, %s66
    %s67 = sphi 0, %s64
    %s68 = sphi 0, %s67
    %s84 = sphi 0, %s68
    %s90 = sphi 0, %s92
    %s93 = sphi 0, %s90
    %s94 = sphi 0, %s93
    %s110 = sphi 0, %s94
    %s120 = sphi 0, %s122
    %s123 = sphi 0, %s120
    %s124 = sphi 0, %s123
    %s140 = sphi 0, %s124
  $region4: #{downsample4_forward.1} parent=0 // loop_header_branch
    %12 = sbr.rel (%p10) target = $region8
  $region5: #{downsample4_forward.1} parent=0 // loop_body
    %s14 = ssub.s32 %s9, 1
    %s15 = ssub.s32 %s9, 2
    %s25 = sadd.s32 1, %s18
    %p26 = scmp.ge.s32.totalorder %s25, 1
    %s27 = scalar_select %p26, 0, %s25
    %s28 = sadd.s32 1, %s17
    %s29 = scalar_select %p26, %s28, %s17
    %p30 = scmp.ge.s32.totalorder %s29, 1
    %s31 = scalar_select %p30, 0, %s29
    %s32 = sadd.s32 1, %s16
    %s33 = scalar_select %p30, %s32, %s16
    %p34 = scmp.ge.s32.totalorder %s33, 2
    %s35 = scalar_select %p34, 0, %s33
    %s36 = ssub.s32 %s16, %s35
    %p37 = scmp.eq.s32.totalorder %s36, 0
    %s39 = sadd.s32 %s38, 1
    %s40 = scalar_select %p37, %s38, %s39
    %p43 = pneg %p37
    %p44 = scmp.eq.s32.totalorder %s9, 1
    %p45 = por %p43, %p44
    %p46 = scmp.ne.s32.totalorder %s38, %s41
    %p47 = scmp.eq.s32.totalorder %s9, 0
    %p48 = por %p46, %p47
    %p49 = scmp.ne.s32.totalorder %s38, %s41
    %p50 = scmp.eq.s32.totalorder %s14, 1
    %p51 = por %p49, %p50
    %p52 = scmp.ne.s32.totalorder %s41, %s42
    %p53 = scmp.eq.s32.totalorder %s14, 0
    %p54 = por %p52, %p53
    %p55 = scmp.ne.s32.totalorder %s41, %s42
    %p56 = scmp.eq.s32.totalorder %s15, 1
    %p57 = por %p55, %p56
    %p59 = scmp.ne.s32.totalorder %s42, %s58
    %p60 = scmp.eq.s32.totalorder %s15, 0
    %p61 = por %p59, %p60
    %s62 = ssub.s32 %s17, %s31
    %p63 = scmp.eq.s32.totalorder %s62, 0
    %s65 = sadd.s32 %s64, 1
    %s66 = scalar_select %p63, %s64, %s65
    %p69 = pneg %p63
    %p70 = scmp.eq.s32.totalorder %s9, 1
    %p71 = por %p69, %p70
    %p72 = scmp.ne.s32.totalorder %s64, %s67
    %p73 = scmp.eq.s32.totalorder %s9, 0
    %p74 = por %p72, %p73
    %p75 = scmp.ne.s32.totalorder %s64, %s67
    %p76 = scmp.eq.s32.totalorder %s14, 1
    %p77 = por %p75, %p76
    %p78 = scmp.ne.s32.totalorder %s67, %s68
    %p79 = scmp.eq.s32.totalorder %s14, 0
    %p80 = por %p78, %p79
    %p81 = scmp.ne.s32.totalorder %s67, %s68
    %p82 = scmp.eq.s32.totalorder %s15, 1
    %p83 = por %p81, %p82
    %p85 = scmp.ne.s32.totalorder %s68, %s84
    %p86 = scmp.eq.s32.totalorder %s15, 0
    %p87 = por %p85, %p86
    %s88 = ssub.s32 %s17, %s31
    %p89 = scmp.eq.s32.totalorder %s88, 0
    %s91 = sadd.s32 %s90, 1
    %s92 = scalar_select %p89, %s90, %s91
    %p95 = pneg %p89
    %p96 = scmp.eq.s32.totalorder %s9, 1
    %p97 = por %p95, %p96
    %p98 = scmp.ne.s32.totalorder %s90, %s93
    %p99 = scmp.eq.s32.totalorder %s9, 0
    %p100 = por %p98, %p99
    %p101 = scmp.ne.s32.totalorder %s90, %s93
    %p102 = scmp.eq.s32.totalorder %s14, 1
    %p103 = por %p101, %p102
    %p104 = scmp.ne.s32.totalorder %s93, %s94
    %p105 = scmp.eq.s32.totalorder %s14, 0
    %p106 = por %p104, %p105
    %p107 = scmp.ne.s32.totalorder %s93, %s94
    %p108 = scmp.eq.s32.totalorder %s15, 1
    %p109 = por %p107, %p108
    %p111 = scmp.ne.s32.totalorder %s94, %s110
    %p112 = scmp.eq.s32.totalorder %s15, 0
    %p113 = por %p111, %p112
    %s114 = ssub.s32 %s16, %s35
    %s115 = ssub.s32 %s18, %s27
    %s116 = sor.u32 %s114, %s115
    %s117 = ssub.s32 %s17, %s31
    %s118 = sor.u32 %s116, %s117
    %p119 = scmp.eq.s32.totalorder %s118, 0
    %s121 = sadd.s32 %s120, 1
    %s122 = scalar_select %p119, %s120, %s121
    %p125 = pneg %p119
    %p126 = scmp.eq.s32.totalorder %s9, 1
    %p127 = por %p125, %p126
    %p128 = scmp.ne.s32.totalorder %s120, %s123
    %p129 = scmp.eq.s32.totalorder %s9, 0
    %p130 = por %p128, %p129
    %p131 = scmp.ne.s32.totalorder %s120, %s123
    %p132 = scmp.eq.s32.totalorder %s14, 1
    %p133 = por %p131, %p132
    %p134 = scmp.ne.s32.totalorder %s123, %s124
    %p135 = scmp.eq.s32.totalorder %s14, 0
    %p136 = por %p134, %p135
    %p137 = scmp.ne.s32.totalorder %s123, %s124
    %p138 = scmp.eq.s32.totalorder %s15, 1
    %p139 = por %p137, %p138
    %p141 = scmp.ne.s32.totalorder %s124, %s140
    %p142 = scmp.eq.s32.totalorder %s15, 0
    %p143 = por %p141, %p142
    %p144 = scmp.le.s32.totalorder 1, %s9
    %p145 = scmp.lt.s32.totalorder %s9, 3
    %p146 = pnand %p144, %p145
    %p147 = pneg %p146
    // Predicated region
    $region9: #{downsample4_forward.1} parent=5 // pred_check
      _
    $region10: #{downsample4_forward.1} parent=5 // pred_check_branch
      %149 = sbr.rel (%p146) target = $region12
    $region11: #{downsample4_forward.1} parent=5 // pred_region
      %s150 = ssub.s32 %s9, 1
      // Predicated region
      $region13: #{downsample4_forward.1} parent=11 // pred_check
        %p151 = pneg %p80
      $region14: #{downsample4_forward.1} parent=11 // pred_check_branch
        %153 = sbr.rel (%p151) target = $region16
      $region15: #{downsample4_forward.1} parent=11 // pred_region
        %p154 = scmp.lt.s32.totalorder %s20, 0
        %s155 = scalar_select %p154, %s20, 0
        %s156 = smul.addr %s155, 8
        %s157 = scalar_lea.vmem %s1, %s156
      $region16: #{downsample4_forward.1} parent=11 // pred_fallthru
        _
      // Predicated region
      $region17: #{downsample4_forward.1} parent=11 // pred_check
        %p158 = pneg %p106
      $region18: #{downsample4_forward.1} parent=11 // pred_check_branch
        %160 = sbr.rel (%p158) target = $region20
      $region19: #{downsample4_forward.1} parent=11 // pred_region
        %p161 = scmp.lt.s32.totalorder %s20, 0
        %s162 = scalar_select %p161, %s20, 0
        %s163 = scalar_lea.vmem %s2, %s162
      $region20: #{downsample4_forward.1} parent=11 // pred_fallthru
        _
    $region12: #{downsample4_forward.1} parent=5 // pred_fallthru
      _
    %p164 = scmp.lt.s32.totalorder %s9, 2
    // Predicated region
    $region21: #{downsample4_forward.1} parent=5 // pred_check
      %p165 = pneg %p164
    $region22: #{downsample4_forward.1} parent=5 // pred_check_branch
      %167 = sbr.rel (%p165) target = $region24
    $region23: #{downsample4_forward.1} parent=5 // pred_region
      // Predicated region
      $region25: #{downsample4_forward.1} parent=23 // pred_check
        %p168 = pneg %p48
      $region26: #{downsample4_forward.1} parent=23 // pred_check_branch
        %170 = sbr.rel (%p168) target = $region28
      $region27: #{downsample4_forward.1} parent=23 // pred_region
        %p171 = scmp.lt.s32.totalorder %s16, 1
        %s172 = scalar_select %p171, %s16, 1
        %s173 = smul.addr %s172, 18
        %s174 = smul.addr %s173, 8
        %s175 = scalar_lea.vmem %s0, %s174
      $region28: #{downsample4_forward.1} parent=23 // pred_fallthru
        _
    $region24: #{downsample4_forward.1} parent=5 // pred_fallthru
      _
    %p176 = scmp.le.s32.totalorder 1, %s9
    %p177 = scmp.lt.s32.totalorder %s9, 3
    %p178 = pnand %p176, %p177
    %p179 = pneg %p178
    // Predicated region
    $region29: #{downsample4_forward.1} parent=5 // pred_check
      _
    $region30: #{downsample4_forward.1} parent=5 // pred_check_branch
      %181 = sbr.rel (%p178) target = $region32
    $region31: #{downsample4_forward.1} parent=5 // pred_region
      %s182 = ssub.s32 %s9, 1
      %p183 = scmp.lt.s32.totalorder %s19, 1
      %s184 = scalar_select %p183, %s19, 1
      %s185 = smul.addr %s184, 18
      %s186 = smul.addr %s185, 8
      %s187 = scalar_lea.vmem %s0, %s186
      %p188 = pneg %p54
      %p189 = pneg %p51
      %p190 = scmp.lt.s32.totalorder %s20, 0
      %s191 = scalar_select %p190, %s20, 0
      %s192 = smul.addr %s191, 8
      %s193 = scalar_lea.vmem %s1, %s192
      %p194 = pneg %p80
      %p195 = pneg %p77
      %p196 = scmp.lt.s32.totalorder %s20, 0
      %s197 = scalar_select %p196, %s20, 0
      %s198 = scalar_lea.vmem %s2, %s197
      %p199 = pneg %p106
      %p200 = pneg %p103
      %p201 = pneg %p136
      %p202 = pneg %p133
      %s203 = smul.u32 8, %s21
      %p204 = scmp.lt.s32.totalorder %s19, 1
      %s205 = scalar_select %p204, %s19, 1
      %p206 = scmp.lt.s32.totalorder %s203, 7
      %s207 = scalar_select %p206, %s203, 7
      %p208 = scmp.lt.s32.totalorder %s20, 0
      %s209 = scalar_select %p208, %s20, 0
      %s210 = sadd.s32 %s209, %s207
      %s211 = smul.addr %s205, 8
      %s212 = sadd.s32 %s210, %s211
      %s213 = smul.addr %s212, 8
      %s214 = scalar_lea.vmem %s3, %s213
      %p215 = scmp.lt.s32.totalorder %s19, 1
      %s216 = scalar_select %p215, %s19, 1
      %s217 = smul.addr %s216, 18
      %s218 = smul.addr %s217, 8
      %s219 = scalar_lea.vmem %s0, %s218
      %p220 = scmp.lt.s32.totalorder %s20, 0
      %s221 = scalar_select %p220, %s20, 0
      %s222 = smul.addr %s221, 8
      %s223 = scalar_lea.vmem %s1, %s222
      %p224 = scmp.lt.s32.totalorder %s20, 0
      %s225 = scalar_select %p224, %s20, 0
      %s226 = scalar_lea.vmem %s2, %s225
      %s227 = smul.u32 8, %s21
      %p228 = scmp.lt.s32.totalorder %s19, 1
      %s229 = scalar_select %p228, %s19, 1
      %p230 = scmp.lt.s32.totalorder %s227, 7
      %s231 = scalar_select %p230, %s227, 7
      %p232 = scmp.lt.s32.totalorder %s20, 0
      %s233 = scalar_select %p232, %s20, 0
      %s234 = sadd.s32 %s233, %s231
      %s235 = smul.addr %s229, 8
      %s236 = sadd.s32 %s234, %s235
      %s237 = smul.addr %s236, 8
      %s238 = scalar_lea.vmem %s3, %s237
      %s239 = smul.u32 8, %s21
      %s240 = smul.u32 %s21, 8
      %s241 = smul.u32 %s240, 16
      %s242 = scalar_lea.vmem %s219, %s241
      %v243 = vld [vmem:[%s242] sm:$0xff]
      %v244 = vld [vmem:[%s242 + $0x8] sm:$0x1]
      %v245 = vld [vmem:[%s242 + $0x10] sm:$0xff]
      %v246 = vld [vmem:[%s242 + $0x18] sm:$0x1]
      %v247 = vld [vmem:[%s242 + $0x20] sm:$0xff]
      %v248 = vld [vmem:[%s242 + $0x28] sm:$0x1]
      %v249 = vld [vmem:[%s242 + $0x30] sm:$0xff]
      %v250 = vld [vmem:[%s242 + $0x38] sm:$0x1]
      %v251 = vld [vmem:[%s242 + $0x40] sm:$0xff]
      %v252 = vld [vmem:[%s242 + $0x48] sm:$0x1]
      %v253 = vld [vmem:[%s242 + $0x50] sm:$0xff]
      %v254 = vld [vmem:[%s242 + $0x58] sm:$0x1]
      %v255 = vld [vmem:[%s242 + $0x60] sm:$0xff]
      %v256 = vld [vmem:[%s242 + $0x68] sm:$0x1]
      %v257 = vld [vmem:[%s242 + $0x70] sm:$0xff]
      %v258 = vld [vmem:[%s242 + $0x78] sm:$0x1]
      %v259 = vld [vmem:[%s223] sm:$0xff]
      %v260 = vld [vmem:[%s223 + $0x8] sm:$0xff]
      %vm277 = vcmask 1046528
      %v278 = vrot.slane %v243, 1
      %v279 = vrot.slane %v244, 1
      %v280 = vsel %vm277, %v278, %v279
      %v281 = vrot.slane %v245, 1
      %v282 = vrot.slane %v246, 1
      %v283 = vsel %vm277, %v281, %v282
      %v284 = vrot.slane %v247, 1
      %v285 = vrot.slane %v248, 1
      %v286 = vsel %vm277, %v284, %v285
      %v287 = vrot.slane %v249, 1
      %v288 = vrot.slane %v250, 1
      %v289 = vsel %vm277, %v287, %v288
      %v290 = vrot.slane %v251, 1
      %v291 = vrot.slane %v252, 1
      %v292 = vsel %vm277, %v290, %v291
      %v293 = vrot.slane %v253, 1
      %v294 = vrot.slane %v254, 1
      %v295 = vsel %vm277, %v293, %v294
      %v296 = vrot.slane %v255, 1
      %v297 = vrot.slane %v256, 1
      %v298 = vsel %vm277, %v296, %v297
      %v299 = vrot.slane %v257, 1
      %v300 = vrot.slane %v258, 1
      %v301 = vsel %vm277, %v299, %v300
      %s302 = scalar_lea.vmem %s223, 16
      %v303 = vld [vmem:[%s302] sm:$0xff]
      %v304 = vld [vmem:[%s302 + $0x8] sm:$0xff]
      %vm305 = vcmask 130048
      %v306 = vsel %vm305, %v280, 0
      %v308 = vsel %vm305, %v283, 0
      %v310 = vsel %vm305, %v286, 0
      %v312 = vsel %vm305, %v289, 0
      %v314 = vsel %vm305, %v292, 0
      %v316 = vsel %vm305, %v295, 0
      %v318 = vsel %vm305, %v298, 0
      %v320 = vsel %vm305, %v301, 0
      %322 = vmatprep.subr.mxu0 0.0
      %323 = vmatpush1.msra.mxu0 %v303
      %324 = vmatprep.subr.mxu0 0.0
      %325 = vmatpush1.msra.mxu0 %v304
      %326 = vmatprep.subr.mxu0 0.0
      %327 = vmatpush1.msra.mxu0 0.0
      %328 = vmatprep.subr.mxu0 0.0
      %329 = vmatpush1.msra.mxu0 0.0
      %330 = vmatprep.subr.mxu0 0.0
      %331 = vmatpush1.msra.mxu0 0.0
      %332 = vmatprep.subr.mxu0 0.0
      %333 = vmatpush1.msra.mxu0 0.0
      %334 = vmatprep.subr.mxu0 0.0
      %335 = vmatpush1.msra.mxu0 0.0
      %336 = vmatprep.subr.mxu0 0.0
      %337 = vmatpush1.msra.mxu0 0.0
      %338 = vmatprep.subr.mxu0 0.0
      %339 = vmatpush1.msra.mxu0 0.0
      %340 = vmatprep.subr.mxu0 0.0
      %341 = vmatpush1.msra.mxu0 0.0
      %342 = vmatprep.subr.mxu0 0.0
      %343 = vmatpush1.msra.mxu0 0.0
      %344 = vmatprep.subr.mxu0 0.0
      %345 = vmatpush1.msra.mxu0 0.0
      %346 = vmatprep.subr.mxu0 0.0
      %347 = vmatpush1.msra.mxu0 0.0
      %348 = vmatprep.subr.mxu0 0.0
      %349 = vmatpush1.msra.mxu0 0.0
      %350 = vmatprep.subr.mxu0 0.0
      %351 = vmatpush1.msra.mxu0 0.0
      %352 = vmatprep.subr.mxu0 0.0
      %353 = vmatpush1.msra.mxu0 0.0
      %354 = vmatprep.subr.mxu0 0.0
      %355 = vmatpush1.msra.mxu0 0.0
      %356 = vmatprep.subr.mxu0 0.0
      %357 = vmatpush1.msra.mxu0 0.0
      %358 = vmatprep.subr.mxu0 0.0
      %359 = vmatpush1.msra.mxu0 0.0
      %360 = vmatprep.subr.mxu0 0.0
      %361 = vmatpush1.msra.mxu0 0.0
      %362 = vmatprep.subr.mxu0 0.0
      %363 = vmatpush1.msra.mxu0 0.0
      %364 = vmatprep.subr.mxu0 0.0
      %365 = vmatpush1.msra.mxu0 0.0
      %366 = vmatprep.subr.mxu0 0.0
      %367 = vmatpush1.msra.mxu0 0.0
      %368 = vmatprep.subr.mxu0 0.0
      %369 = vmatpush1.msra.mxu0 0.0
      %370 = vmatprep.subr.mxu0 0.0
      %371 = vmatpush1.msra.mxu0 0.0
      %372 = vmatprep.subr.mxu0 0.0
      %373 = vmatpush1.msra.mxu0 0.0
      %374 = vmatprep.subr.mxu0 0.0
      %375 = vmatpush1.msra.mxu0 0.0
      %376 = vmatprep.subr.mxu0 0.0
      %377 = vmatpush1.msra.mxu0 0.0
      %378 = vmatprep.subr.mxu0 0.0
      %379 = vmatpush1.msra.mxu0 0.0
      %380 = vmatprep.subr.mxu0 0.0
      %381 = vmatpush1.msra.mxu0 0.0
      %382 = vmatprep.subr.mxu0 0.0
      %383 = vmatpush1.msra.mxu0 0.0
      %384 = vmatprep.subr.mxu0 0.0
      %385 = vmatpush1.msra.mxu0 0.0
      %386 = vmatprep.mubr.f32.mxu0 0.0
      %387 = vmatmul.mubr.f32.gmra.mrb[0].mxu0 %v306
      %v388 = vpop.f32.mrb[0].mxu0
      %v389 = vadd.f32 0.0, %v388
      %v390 = vpop.f32.mrb[0].mxu0
      %391 = vmatprep.mubr.f32.mxu0 0.0
      %392 = vmatmul.mubr.f32.gmra.mrb[0].mxu0 %v308
      %v393 = vpop.f32.mrb[0].mxu0
      %v394 = vadd.f32 0.0, %v393
      %v395 = vpop.f32.mrb[0].mxu0
      %396 = vmatprep.mubr.f32.mxu0 0.0
      %397 = vmatmul.mubr.f32.gmra.mrb[0].mxu0 %v310
      %v398 = vpop.f32.mrb[0].mxu0
      %v399 = vadd.f32 0.0, %v398
      %v400 = vpop.f32.mrb[0].mxu0
      %401 = vmatprep.mubr.f32.mxu0 0.0
      %402 = vmatmul.mubr.f32.gmra.mrb[0].mxu0 %v312
      %v403 = vpop.f32.mrb[0].mxu0
      %v404 = vadd.f32 0.0, %v403
      %v405 = vpop.f32.mrb[0].mxu0
      %406 = vmatprep.mubr.f32.mxu0 0.0
      %407 = vmatmul.mubr.f32.gmra.mrb[0].mxu0 %v314
      %v408 = vpop.f32.mrb[0].mxu0
      %v409 = vadd.f32 0.0, %v408
      %v410 = vpop.f32.mrb[0].mxu0
      %411 = vmatprep.mubr.f32.mxu0 0.0
      %412 = vmatmul.mubr.f32.gmra.mrb[0].mxu0 %v316
      %v413 = vpop.f32.mrb[0].mxu0
      %v414 = vadd.f32 0.0, %v413
      %v415 = vpop.f32.mrb[0].mxu0
      %416 = vmatprep.mubr.f32.mxu0 0.0
      %417 = vmatmul.mubr.f32.gmra.mrb[0].mxu0 %v318
      %v418 = vpop.f32.mrb[0].mxu0
      %v419 = vadd.f32 0.0, %v418
      %v420 = vpop.f32.mrb[0].mxu0
      %421 = vmatprep.mubr.f32.mxu0 0.0
      %422 = vmatmul.mubr.f32.gmra.mrb[0].mxu0 %v320
      %v423 = vpop.f32.mrb[0].mxu0
      %v424 = vadd.f32 0.0, %v423
      %v425 = vpop.f32.mrb[0].mxu0
      %426 = vdwg.mxu0
      %v427 = vsel %vm305, %v243, 0
      %v429 = vsel %vm305, %v245, 0
      %v431 = vsel %vm305, %v247, 0
      %v433 = vsel %vm305, %v249, 0
      %v435 = vsel %vm305, %v251, 0
      %v437 = vsel %vm305, %v253, 0
      %v439 = vsel %vm305, %v255, 0
      %v441 = vsel %vm305, %v257, 0
      %443 = vmatprep.subr.mxu0 0.0
      %444 = vmatpush1.msra.mxu0 %v259
      %445 = vmatprep.subr.mxu0 0.0
      %446 = vmatpush1.msra.mxu0 %v260
      %447 = vmatprep.subr.mxu0 0.0
      %448 = vmatpush1.msra.mxu0 0.0
      %449 = vmatprep.subr.mxu0 0.0
      %450 = vmatpush1.msra.mxu0 0.0
      %451 = vmatprep.subr.mxu0 0.0
      %452 = vmatpush1.msra.mxu0 0.0
      %453 = vmatprep.subr.mxu0 0.0
      %454 = vmatpush1.msra.mxu0 0.0
      %455 = vmatprep.subr.mxu0 0.0
      %456 = vmatpush1.msra.mxu0 0.0
      %457 = vmatprep.subr.mxu0 0.0
      %458 = vmatpush1.msra.mxu0 0.0
      %459 = vmatprep.subr.mxu0 0.0
      %460 = vmatpush1.msra.mxu0 0.0
      %461 = vmatprep.subr.mxu0 0.0
      %462 = vmatpush1.msra.mxu0 0.0
      %463 = vmatprep.subr.mxu0 0.0
      %464 = vmatpush1.msra.mxu0 0.0
      %465 = vmatprep.subr.mxu0 0.0
      %466 = vmatpush1.msra.mxu0 0.0
      %467 = vmatprep.subr.mxu0 0.0
      %468 = vmatpush1.msra.mxu0 0.0
      %469 = vmatprep.subr.mxu0 0.0
      %470 = vmatpush1.msra.mxu0 0.0
      %471 = vmatprep.subr.mxu0 0.0
      %472 = vmatpush1.msra.mxu0 0.0
      %473 = vmatprep.subr.mxu0 0.0
      %474 = vmatpush1.msra.mxu0 0.0
      %475 = vmatprep.subr.mxu0 0.0
      %476 = vmatpush1.msra.mxu0 0.0
      %477 = vmatprep.subr.mxu0 0.0
      %478 = vmatpush1.msra.mxu0 0.0
      %479 = vmatprep.subr.mxu0 0.0
      %480 = vmatpush1.msra.mxu0 0.0
      %481 = vmatprep.subr.mxu0 0.0
      %482 = vmatpush1.msra.mxu0 0.0
      %483 = vmatprep.subr.mxu0 0.0
      %484 = vmatpush1.msra.mxu0 0.0
      %485 = vmatprep.subr.mxu0 0.0
      %486 = vmatpush1.msra.mxu0 0.0
      %487 = vmatprep.subr.mxu0 0.0
      %488 = vmatpush1.msra.mxu0 0.0
      %489 = vmatprep.subr.mxu0 0.0
      %490 = vmatpush1.msra.mxu0 0.0
      %491 = vmatprep.subr.mxu0 0.0
      %492 = vmatpush1.msra.mxu0 0.0
      %493 = vmatprep.subr.mxu0 0.0
      %494 = vmatpush1.msra.mxu0 0.0
      %495 = vmatprep.subr.mxu0 0.0
      %496 = vmatpush1.msra.mxu0 0.0
      %497 = vmatprep.subr.mxu0 0.0
      %498 = vmatpush1.msra.mxu0 0.0
      %499 = vmatprep.subr.mxu0 0.0
      %500 = vmatpush1.msra.mxu0 0.0
      %501 = vmatprep.subr.mxu0 0.0
      %502 = vmatpush1.msra.mxu0 0.0
      %503 = vmatprep.subr.mxu0 0.0
      %504 = vmatpush1.msra.mxu0 0.0
      %505 = vmatprep.subr.mxu0 0.0
      %506 = vmatpush1.msra.mxu0 0.0
      %507 = vmatprep.mubr.f32.mxu0 0.0
      %508 = vmatmul.mubr.f32.gmra.mrb[0].mxu0 %v427
      %v509 = vpop.f32.mrb[0].mxu0
      %v510 = vadd.f32 %v389, %v509
      %v511 = vpop.f32.mrb[0].mxu0
      %512 = vmatprep.mubr.f32.mxu0 0.0
      %513 = vmatmul.mubr.f32.gmra.mrb[0].mxu0 %v429
      %v514 = vpop.f32.mrb[0].mxu0
      %v515 = vadd.f32 %v394, %v514
      %v516 = vpop.f32.mrb[0].mxu0
      %517 = vmatprep.mubr.f32.mxu0 0.0
      %518 = vmatmul.mubr.f32.gmra.mrb[0].mxu0 %v431
      %v519 = vpop.f32.mrb[0].mxu0
      %v520 = vadd.f32 %v399, %v519
      %v521 = vpop.f32.mrb[0].mxu0
      %522 = vmatprep.mubr.f32.mxu0 0.0
      %523 = vmatmul.mubr.f32.gmra.mrb[0].mxu0 %v433
      %v524 = vpop.f32.mrb[0].mxu0
      %v525 = vadd.f32 %v404, %v524
      %v526 = vpop.f32.mrb[0].mxu0
      %527 = vmatprep.mubr.f32.mxu0 0.0
      %528 = vmatmul.mubr.f32.gmra.mrb[0].mxu0 %v435
      %v529 = vpop.f32.mrb[0].mxu0
      %v530 = vadd.f32 %v409, %v529
      %v531 = vpop.f32.mrb[0].mxu0
      %532 = vmatprep.mubr.f32.mxu0 0.0
      %533 = vmatmul.mubr.f32.gmra.mrb[0].mxu0 %v437
      %v534 = vpop.f32.mrb[0].mxu0
      %v535 = vadd.f32 %v414, %v534
      %v536 = vpop.f32.mrb[0].mxu0
      %537 = vmatprep.mubr.f32.mxu0 0.0
      %538 = vmatmul.mubr.f32.gmra.mrb[0].mxu0 %v439
      %v539 = vpop.f32.mrb[0].mxu0
      %v540 = vadd.f32 %v419, %v539
      %v541 = vpop.f32.mrb[0].mxu0
      %542 = vmatprep.mubr.f32.mxu0 0.0
      %543 = vmatmul.mubr.f32.gmra.mrb[0].mxu0 %v441
      %v544 = vpop.f32.mrb[0].mxu0
      %v545 = vadd.f32 %v424, %v544
      %v546 = vpop.f32.mrb[0].mxu0
      %547 = vdwg.mxu0
      %s548 = sadd.s32 %s240, 1
      %s549 = smul.u32 %s548, 16
      %s550 = scalar_lea.vmem %s219, %s549
      %v551 = vld [vmem:[%s550] sm:$0xff]
      %v552 = vld [vmem:[%s550 + $0x8] sm:$0x1]
      %v553 = vld [vmem:[%s550 + $0x10] sm:$0xff]
      %v554 = vld [vmem:[%s550 + $0x18] sm:$0x1]
      %v555 = vld [vmem:[%s550 + $0x20] sm:$0xff]
      %v556 = vld [vmem:[%s550 + $0x28] sm:$0x1]
      %v557 = vld [vmem:[%s550 + $0x30] sm:$0xff]
      %v558 = vld [vmem:[%s550 + $0x38] sm:$0x1]
      %v559 = vld [vmem:[%s550 + $0x40] sm:$0xff]
      %v560 = vld [vmem:[%s550 + $0x48] sm:$0x1]
      %v561 = vld [vmem:[%s550 + $0x50] sm:$0xff]
      %v562 = vld [vmem:[%s550 + $0x58] sm:$0x1]
      %v563 = vld [vmem:[%s550 + $0x60] sm:$0xff]
      %v564 = vld [vmem:[%s550 + $0x68] sm:$0x1]
      %v565 = vld [vmem:[%s550 + $0x70] sm:$0xff]
      %v566 = vld [vmem:[%s550 + $0x78] sm:$0x1]
      %s567 = scalar_lea.vmem %s223, 32
      %v568 = vld [vmem:[%s567] sm:$0xff]
      %v569 = vld [vmem:[%s567 + $0x8] sm:$0xff]
      %v571 = vsel %vm305, %v551, 0
      %v574 = vsel %vm305, %v553, 0
      %v577 = vsel %vm305, %v555, 0
      %v580 = vsel %vm305, %v557, 0
      %v583 = vsel %vm305, %v559, 0
      %v586 = vsel %vm305, %v561, 0
      %v589 = vsel %vm305, %v563, 0
      %v592 = vsel %vm305, %v565, 0
      %594 = vmatprep.subr.mxu0 0.0
      %595 = vmatpush1.msra.mxu0 %v568
      %596 = vmatprep.subr.mxu0 0.0
      %597 = vmatpush1.msra.mxu0 %v569
      %598 = vmatprep.subr.mxu0 0.0
      %599 = vmatpush1.msra.mxu0 0.0
      %600 = vmatprep.subr.mxu0 0.0
      %601 = vmatpush1.msra.mxu0 0.0
      %602 = vmatprep.subr.mxu0 0.0
      %603 = vmatpush1.msra.mxu0 0.0
      %604 = vmatprep.subr.mxu0 0.0
      %605 = vmatpush1.msra.mxu0 0.0
      %606 = vmatprep.subr.mxu0 0.0
      %607 = vmatpush1.msra.mxu0 0.0
      %608 = vmatprep.subr.mxu0 0.0
      %609 = vmatpush1.msra.mxu0 0.0
      %610 = vmatprep.subr.mxu0 0.0
      %611 = vmatpush1.msra.mxu0 0.0
      %612 = vmatprep.subr.mxu0 0.0
      %613 = vmatpush1.msra.mxu0 0.0
      %614 = vmatprep.subr.mxu0 0.0
      %615 = vmatpush1.msra.mxu0 0.0
      %616 = vmatprep.subr.mxu0 0.0
      %617 = vmatpush1.msra.mxu0 0.0
      %618 = vmatprep.subr.mxu0 0.0
      %619 = vmatpush1.msra.mxu0 0.0
      %620 = vmatprep.subr.mxu0 0.0
      %621 = vmatpush1.msra.mxu0 0.0
      %622 = vmatprep.subr.mxu0 0.0
      %623 = vmatpush1.msra.mxu0 0.0
      %624 = vmatprep.subr.mxu0 0.0
      %625 = vmatpush1.msra.mxu0 0.0
      %626 = vmatprep.subr.mxu0 0.0
      %627 = vmatpush1.msra.mxu0 0.0
      %628 = vmatprep.subr.mxu0 0.0
      %629 = vmatpush1.msra.mxu0 0.0
      %630 = vmatprep.subr.mxu0 0.0
      %631 = vmatpush1.msra.mxu0 0.0
      %632 = vmatprep.subr.mxu0 0.0
      %633 = vmatpush1.msra.mxu0 0.0
      %634 = vmatprep.subr.mxu0 0.0
      %635 = vmatpush1.msra.mxu0 0.0
      %636 = vmatprep.subr.mxu0 0.0
      %637 = vmatpush1.msra.mxu0 0.0
      %638 = vmatprep.subr.mxu0 0.0
      %639 = vmatpush1.msra.mxu0 0.0
      %640 = vmatprep.subr.mxu0 0.0
      %641 = vmatpush1.msra.mxu0 0.0
      %642 = vmatprep.subr.mxu0 0.0
      %643 = vmatpush1.msra.mxu0 0.0
      %644 = vmatprep.subr.mxu0 0.0
      %645 = vmatpush1.msra.mxu0 0.0
      %646 = vmatprep.subr.mxu0 0.0
      %647 = vmatpush1.msra.mxu0 0.0
      %648 = vmatprep.subr.mxu0 0.0
      %649 = vmatpush1.msra.mxu0 0.0
      %650 = vmatprep.subr.mxu0 0.0
      %651 = vmatpush1.msra.mxu0 0.0
      %652 = vmatprep.subr.mxu0 0.0
      %653 = vmatpush1.msra.mxu0 0.0
      %654 = vmatprep.subr.mxu0 0.0
      %655 = vmatpush1.msra.mxu0 0.0
      %656 = vmatprep.subr.mxu0 0.0
      %657 = vmatpush1.msra.mxu0 0.0
      %658 = vmatprep.mubr.f32.mxu0 0.0
      %659 = vmatmul.mubr.f32.gmra.mrb[0].mxu0 %v571
      %v660 = vpop.f32.mrb[0].mxu0
      %v661 = vadd.f32 0.0, %v660
      %v662 = vpop.f32.mrb[0].mxu0
      %663 = vmatprep.mubr.f32.mxu0 0.0
      %664 = vmatmul.mubr.f32.gmra.mrb[0].mxu0 %v574
      %v665 = vpop.f32.mrb[0].mxu0
      %v666 = vadd.f32 0.0, %v665
      %v667 = vpop.f32.mrb[0].mxu0
      %668 = vmatprep.mubr.f32.mxu0 0.0
      %669 = vmatmul.mubr.f32.gmra.mrb[0].mxu0 %v577
      %v670 = vpop.f32.mrb[0].mxu0
      %v671 = vadd.f32 0.0, %v670
      %v672 = vpop.f32.mrb[0].mxu0
      %673 = vmatprep.mubr.f32.mxu0 0.0
      %674 = vmatmul.mubr.f32.gmra.mrb[0].mxu0 %v580
      %v675 = vpop.f32.mrb[0].mxu0
      %v676 = vadd.f32 0.0, %v675
      %v677 = vpop.f32.mrb[0].mxu0
      %678 = vmatprep.mubr.f32.mxu0 0.0
      %679 = vmatmul.mubr.f32.gmra.mrb[0].mxu0 %v583
      %v680 = vpop.f32.mrb[0].mxu0
      %v681 = vadd.f32 0.0, %v680
      %v682 = vpop.f32.mrb[0].mxu0
      %683 = vmatprep.mubr.f32.mxu0 0.0
      %684 = vmatmul.mubr.f32.gmra.mrb[0].mxu0 %v586
      %v685 = vpop.f32.mrb[0].mxu0
      %v686 = vadd.f32 0.0, %v685
      %v687 = vpop.f32.mrb[0].mxu0
      %688 = vmatprep.mubr.f32.mxu0 0.0
      %689 = vmatmul.mubr.f32.gmra.mrb[0].mxu0 %v589
      %v690 = vpop.f32.mrb[0].mxu0
      %v691 = vadd.f32 0.0, %v690
      %v692 = vpop.f32.mrb[0].mxu0
      %693 = vmatprep.mubr.f32.mxu0 0.0
      %694 = vmatmul.mubr.f32.gmra.mrb[0].mxu0 %v592
      %v695 = vpop.f32.mrb[0].mxu0
      %v696 = vadd.f32 0.0, %v695
      %v697 = vpop.f32.mrb[0].mxu0
      %698 = vdwg.mxu0
      %v699 = vadd.f32 %v510, %v661
      %v700 = vadd.f32 %v515, %v666
      %v701 = vadd.f32 %v520, %v671
      %v702 = vadd.f32 %v525, %v676
      %v703 = vadd.f32 %v530, %v681
      %v704 = vadd.f32 %v535, %v686
      %v705 = vadd.f32 %v540, %v691
      %v706 = vadd.f32 %v545, %v696
      %v715 = vrot.slane %v551, 1
      %v716 = vrot.slane %v552, 1
      %v717 = vsel %vm277, %v715, %v716
      %v718 = vrot.slane %v553, 1
      %v719 = vrot.slane %v554, 1
      %v720 = vsel %vm277, %v718, %v719
      %v721 = vrot.slane %v555, 1
      %v722 = vrot.slane %v556, 1
      %v723 = vsel %vm277, %v721, %v722
      %v724 = vrot.slane %v557, 1
      %v725 = vrot.slane %v558, 1
      %v726 = vsel %vm277, %v724, %v725
      %v727 = vrot.slane %v559, 1
      %v728 = vrot.slane %v560, 1
      %v729 = vsel %vm277, %v727, %v728
      %v730 = vrot.slane %v561, 1
      %v731 = vrot.slane %v562, 1
      %v732 = vsel %vm277, %v730, %v731
      %v733 = vrot.slane %v563, 1
      %v734 = vrot.slane %v564, 1
      %v735 = vsel %vm277, %v733, %v734
      %v736 = vrot.slane %v565, 1
      %v737 = vrot.slane %v566, 1
      %v738 = vsel %vm277, %v736, %v737
      %s739 = scalar_lea.vmem %s223, 48
      %v740 = vld [vmem:[%s739] sm:$0xff]
      %v741 = vld [vmem:[%s739 + $0x8] sm:$0xff]
      %v742 = vsel %vm305, %v717, 0
      %v744 = vsel %vm305, %v720, 0
      %v746 = vsel %vm305, %v723, 0
      %v748 = vsel %vm305, %v726, 0
      %v750 = vsel %vm305, %v729, 0
      %v752 = vsel %vm305, %v732, 0
      %v754 = vsel %vm305, %v735, 0
      %v756 = vsel %vm305, %v738, 0
      %758 = vmatprep.subr.mxu0 0.0
      %759 = vmatpush1.msra.mxu0 %v740
      %760 = vmatprep.subr.mxu0 0.0
      %761 = vmatpush1.msra.mxu0 %v741
      %762 = vmatprep.subr.mxu0 0.0
      %763 = vmatpush1.msra.mxu0 0.0
      %764 = vmatprep.subr.mxu0 0.0
      %765 = vmatpush1.msra.mxu0 0.0
      %766 = vmatprep.subr.mxu0 0.0
      %767 = vmatpush1.msra.mxu0 0.0
      %768 = vmatprep.subr.mxu0 0.0
      %769 = vmatpush1.msra.mxu0 0.0
      %770 = vmatprep.subr.mxu0 0.0
      %771 = vmatpush1.msra.mxu0 0.0
      %772 = vmatprep.subr.mxu0 0.0
      %773 = vmatpush1.msra.mxu0 0.0
      %774 = vmatprep.subr.mxu0 0.0
      %775 = vmatpush1.msra.mxu0 0.0
      %776 = vmatprep.subr.mxu0 0.0
      %777 = vmatpush1.msra.mxu0 0.0
      %778 = vmatprep.subr.mxu0 0.0
      %779 = vmatpush1.msra.mxu0 0.0
      %780 = vmatprep.subr.mxu0 0.0
      %781 = vmatpush1.msra.mxu0 0.0
      %782 = vmatprep.subr.mxu0 0.0
      %783 = vmatpush1.msra.mxu0 0.0
      %784 = vmatprep.subr.mxu0 0.0
      %785 = vmatpush1.msra.mxu0 0.0
      %786 = vmatprep.subr.mxu0 0.0
      %787 = vmatpush1.msra.mxu0 0.0
      %788 = vmatprep.subr.mxu0 0.0
      %789 = vmatpush1.msra.mxu0 0.0
      %790 = vmatprep.subr.mxu0 0.0
      %791 = vmatpush1.msra.mxu0 0.0
      %792 = vmatprep.subr.mxu0 0.0
      %793 = vmatpush1.msra.mxu0 0.0
      %794 = vmatprep.subr.mxu0 0.0
      %795 = vmatpush1.msra.mxu0 0.0
      %796 = vmatprep.subr.mxu0 0.0
      %797 = vmatpush1.msra.mxu0 0.0
      %798 = vmatprep.subr.mxu0 0.0
      %799 = vmatpush1.msra.mxu0 0.0
      %800 = vmatprep.subr.mxu0 0.0
      %801 = vmatpush1.msra.mxu0 0.0
      %802 = vmatprep.subr.mxu0 0.0
      %803 = vmatpush1.msra.mxu0 0.0
      %804 = vmatprep.subr.mxu0 0.0
      %805 = vmatpush1.msra.mxu0 0.0
      %806 = vmatprep.subr.mxu0 0.0
      %807 = vmatpush1.msra.mxu0 0.0
      %808 = vmatprep.subr.mxu0 0.0
      %809 = vmatpush1.msra.mxu0 0.0
      %810 = vmatprep.subr.mxu0 0.0
      %811 = vmatpush1.msra.mxu0 0.0
      %812 = vmatprep.subr.mxu0 0.0
      %813 = vmatpush1.msra.mxu0 0.0
      %814 = vmatprep.subr.mxu0 0.0
      %815 = vmatpush1.msra.mxu0 0.0
      %816 = vmatprep.subr.mxu0 0.0
      %817 = vmatpush1.msra.mxu0 0.0
      %818 = vmatprep.subr.mxu0 0.0
      %819 = vmatpush1.msra.mxu0 0.0
      %820 = vmatprep.subr.mxu0 0.0
      %821 = vmatpush1.msra.mxu0 0.0
      %822 = vmatprep.mubr.f32.mxu0 0.0
      %823 = vmatmul.mubr.f32.gmra.mrb[0].mxu0 %v742
      %v824 = vpop.f32.mrb[0].mxu0
      %v825 = vadd.f32 0.0, %v824
      %v826 = vpop.f32.mrb[0].mxu0
      %827 = vmatprep.mubr.f32.mxu0 0.0
      %828 = vmatmul.mubr.f32.gmra.mrb[0].mxu0 %v744
      %v829 = vpop.f32.mrb[0].mxu0
      %v830 = vadd.f32 0.0, %v829
      %v831 = vpop.f32.mrb[0].mxu0
      %832 = vmatprep.mubr.f32.mxu0 0.0
      %833 = vmatmul.mubr.f32.gmra.mrb[0].mxu0 %v746
      %v834 = vpop.f32.mrb[0].mxu0
      %v835 = vadd.f32 0.0, %v834
      %v836 = vpop.f32.mrb[0].mxu0
      %837 = vmatprep.mubr.f32.mxu0 0.0
      %838 = vmatmul.mubr.f32.gmra.mrb[0].mxu0 %v748
      %v839 = vpop.f32.mrb[0].mxu0
      %v840 = vadd.f32 0.0, %v839
      %v841 = vpop.f32.mrb[0].mxu0
      %842 = vmatprep.mubr.f32.mxu0 0.0
      %843 = vmatmul.mubr.f32.gmra.mrb[0].mxu0 %v750
      %v844 = vpop.f32.mrb[0].mxu0
      %v845 = vadd.f32 0.0, %v844
      %v846 = vpop.f32.mrb[0].mxu0
      %847 = vmatprep.mubr.f32.mxu0 0.0
      %848 = vmatmul.mubr.f32.gmra.mrb[0].mxu0 %v752
      %v849 = vpop.f32.mrb[0].mxu0
      %v850 = vadd.f32 0.0, %v849
      %v851 = vpop.f32.mrb[0].mxu0
      %852 = vmatprep.mubr.f32.mxu0 0.0
      %853 = vmatmul.mubr.f32.gmra.mrb[0].mxu0 %v754
      %v854 = vpop.f32.mrb[0].mxu0
      %v855 = vadd.f32 0.0, %v854
      %v856 = vpop.f32.mrb[0].mxu0
      %857 = vmatprep.mubr.f32.mxu0 0.0
      %858 = vmatmul.mubr.f32.gmra.mrb[0].mxu0 %v756
      %v859 = vpop.f32.mrb[0].mxu0
      %v860 = vadd.f32 0.0, %v859
      %v861 = vpop.f32.mrb[0].mxu0
      %862 = vdwg.mxu0
      %v863 = vadd.f32 %v699, %v825
      %v864 = vadd.f32 %v700, %v830
      %v865 = vadd.f32 %v701, %v835
      %v866 = vadd.f32 %v702, %v840
      %v867 = vadd.f32 %v703, %v845
      %v868 = vadd.f32 %v704, %v850
      %v869 = vadd.f32 %v705, %v855
      %v870 = vadd.f32 %v706, %v860
      %v871 = vld [vmem:[%s226] sm:$0x1]
      %v873 = vlaneseq
      %v874 = vshrl.u32 %v873, 7
      %v875 = vsub.s32 0, %v874
      %v876 = vrot.slane %v871, %v875
      %v878 = vadd.f32 %v863, %v876
      %v879 = vadd.f32 %v864, %v876
      %v880 = vadd.f32 %v865, %v876
      %v881 = vadd.f32 %v866, %v876
      %v882 = vadd.f32 %v867, %v876
      %v883 = vadd.f32 %v868, %v876
      %v884 = vadd.f32 %v869, %v876
      %v885 = vadd.f32 %v870, %v876
      %886 = vst [vmem:[%s238] sm:$0xff] %v878
      %887 = vst [vmem:[%s238 + $0x8] sm:$0xff] %v879
      %888 = vst [vmem:[%s238 + $0x10] sm:$0xff] %v880
      %889 = vst [vmem:[%s238 + $0x18] sm:$0xff] %v881
      %890 = vst [vmem:[%s238 + $0x20] sm:$0xff] %v882
      %891 = vst [vmem:[%s238 + $0x28] sm:$0xff] %v883
      %892 = vst [vmem:[%s238 + $0x30] sm:$0xff] %v884
      %893 = vst [vmem:[%s238 + $0x38] sm:$0xff] %v885
      %s894 = smul.u32 8, %s21
      %p895 = scmp.lt.s32.totalorder %s19, 1
      %s896 = scalar_select %p895, %s19, 1
      %p897 = scmp.lt.s32.totalorder %s894, 7
      %s898 = scalar_select %p897, %s894, 7
      %p899 = scmp.lt.s32.totalorder %s20, 0
      %s900 = scalar_select %p899, %s20, 0
      %s901 = sadd.s32 %s900, %s898
      %s902 = smul.addr %s896, 8
      %s903 = sadd.s32 %s901, %s902
      %s904 = smul.addr %s903, 8
      %s905 = scalar_lea.vmem %s3, %s904
      // Predicated region
      $region33: #{downsample4_forward.1} parent=31 // pred_check
        %p906 = pneg %p133
      $region34: #{downsample4_forward.1} parent=31 // pred_check_branch
        %908 = sbr.rel (%p906) target = $region36
      $region35: #{downsample4_forward.1} parent=31 // pred_region
        %s909 = smul.u32 8, %s21
      $region36: #{downsample4_forward.1} parent=31 // pred_fallthru
        _
    $region32: #{downsample4_forward.1} parent=5 // pred_fallthru
      _
    %p910 = scmp.le.s32.totalorder 2, %s9
    // Predicated region
    $region37: #{downsample4_forward.1} parent=5 // pred_check
      %p911 = pneg %p910
    $region38: #{downsample4_forward.1} parent=5 // pred_check_branch
      %913 = sbr.rel (%p911) target = $region40
    $region39: #{downsample4_forward.1} parent=5 // pred_region
      %s914 = ssub.s32 %s9, 2
      // Predicated region
      $region41: #{downsample4_forward.1} parent=39 // pred_check
        %p915 = pneg %p139
      $region42: #{downsample4_forward.1} parent=39 // pred_check_branch
        %917 = sbr.rel (%p915) target = $region44
      $region43: #{downsample4_forward.1} parent=39 // pred_region
        %s918 = smul.u32 8, %s24
        %p919 = scmp.lt.s32.totalorder %s22, 1
        %s920 = scalar_select %p919, %s22, 1
        %p921 = scmp.lt.s32.totalorder %s918, 7
        %s922 = scalar_select %p921, %s918, 7
        %p923 = scmp.lt.s32.totalorder %s23, 0
        %s924 = scalar_select %p923, %s23, 0
        %s925 = sadd.s32 %s924, %s922
        %s926 = smul.addr %s920, 8
        %s927 = sadd.s32 %s925, %s926
        %s928 = smul.addr %s927, 8
        %s929 = scalar_lea.vmem %s3, %s928
      $region44: #{downsample4_forward.1} parent=39 // pred_fallthru
        _
    $region40: #{downsample4_forward.1} parent=5 // pred_fallthru
      _
  $region6: #{downsample4_forward.1} parent=0 // loop_footer
    %s13 = sadd.s32 1, %s9
  $region7: #{downsample4_forward.1} parent=0 // loop_footer_branch
    %8 = sbr.rel target = $region3
  $region8: #{downsample4_forward.1} parent=0 // loop_exit
    _

</llo_original>
